<compile_context>
chip_gen: v7x
topology: tpu7x:2x2x1
jax: 0.10.0
libtpu: 0.0.40
codegen_flags: <defaults>
</compile_context>

<pallas_src>
import jax
import jax.numpy as jnp
from jax.experimental import pallas as pl
from jax.experimental.pallas import tpu as pltpu

_C_OUT = 3
_EPS = 1e-5


def _conv_bn_kernel(p_ref, x_ref, o_ref):
    # p_ref: (4, 3) f32 in SMEM: rows = [conv_w, conv_b, bn_gamma, bn_beta]
    # x_ref: (N, H*W) f32 in VMEM (the single input channel, lane-dense)
    # o_ref: (3, N, H*W) f32 in VMEM (per-output-channel slabs, lane-dense)
    x = x_ref[...]
    inv_count = 1.0 / float(x.shape[0] * x.shape[1])   # static python constant
    for c in range(_C_OUT):                            # unrolled at trace time
        w_c = p_ref[0, c]
        b_c = p_ref[1, c]
        g_c = p_ref[2, c]
        beta_c = p_ref[3, c]
        # 1x1 conv, single input channel -> pure VPU scalar*vector FMA
        conv = x * w_c + b_c
        # training-mode BatchNorm: batch mean / biased variance per channel
        mu = jnp.sum(conv) * inv_count
        centered = conv - mu
        var = jnp.sum(centered * centered) * inv_count
        scale = g_c * jax.lax.rsqrt(var + _EPS)
        o_ref[c] = centered * scale + beta_c


def decomp_example_forward(x, conv_w, conv_b, bn_gamma, bn_beta):
    """Mirrors DecompExample.forward (Conv2d(1,3,1,1) + BatchNorm2d(3), training mode)."""
    n, c_in, h, w = x.shape
    assert c_in == 1
    hw = h * w

    x2d = x.reshape(n, hw).astype(jnp.float32)               # (N, H*W), lane-dense
    params = jnp.stack(
        [conv_w.reshape(_C_OUT), conv_b, bn_gamma, bn_beta]
    ).astype(jnp.float32)                                     # (4, 3) -> one SMEM DMA

    out = pl.pallas_call(
        _conv_bn_kernel,
        out_shape=jax.ShapeDtypeStruct((_C_OUT, n, hw), jnp.float32),
        in_specs=[
            pl.BlockSpec(memory_space=pltpu.MemorySpace.SMEM),   # packed scalars
            pl.BlockSpec((n, hw), lambda: (0, 0)),               # image slab (VMEM)
        ],
        out_specs=pl.BlockSpec((_C_OUT, n, hw), lambda: (0, 0, 0)),
    )(params, x2d)

    # (C, N, H*W) -> (N, C, H, W); tiny wrapper-side layout glue.
    y = jnp.transpose(out, (1, 0, 2)).reshape(n, _C_OUT, h, w)
    return (y,)


def _reference(x, conv_w, conv_b, bn_gamma, bn_beta):
    conv = x * conv_w.reshape(1, _C_OUT, 1, 1) + conv_b.reshape(1, _C_OUT, 1, 1)
    mu = conv.mean(axis=(0, 2, 3), keepdims=True)
    var = ((conv - mu) ** 2).mean(axis=(0, 2, 3), keepdims=True)
    return (
        bn_gamma.reshape(1, _C_OUT, 1, 1) * (conv - mu) * jax.lax.rsqrt(var + _EPS)
        + bn_beta.reshape(1, _C_OUT, 1, 1)
    )


if __name__ == "__main__":
    key = jax.random.PRNGKey(0)
    kx, kw, kb, kg, kbeta = jax.random.split(key, 5)

    # Small shapes consistent with Conv2d(1, 3, 1, 1): batch=2, 1 channel, 16x16.
    x = jax.random.normal(kx, (2, 1, 16, 16), dtype=jnp.float32)
    conv_w = jax.random.normal(kw, (3, 1, 1, 1), dtype=jnp.float32) * 0.5
    conv_b = jax.random.normal(kb, (3,), dtype=jnp.float32) * 0.1
    bn_gamma = 1.0 + 0.1 * jax.random.normal(kg, (3,), dtype=jnp.float32)
    bn_beta = 0.1 * jax.random.normal(kbeta, (3,), dtype=jnp.float32)

    (y,) = decomp_example_forward(x, conv_w, conv_b, bn_gamma, bn_beta)
    jax.block_until_ready(y)

    y_ref = _reference(x, conv_w, conv_b, bn_gamma, bn_beta)
    assert y.shape == (2, 3, 16, 16)
    assert jnp.allclose(y, y_ref, atol=1e-4, rtol=1e-4)

    print("KERNEL_OK")
</pallas_src>

<mosaic_0001>
module attributes {stable_mosaic.version = 11 : i64} {
  func.func @_conv_bn_kernel(%arg0: memref<4x3xf32, #tpu.memory_space<smem>>, %arg1: memref<2x256xf32, #tpu.memory_space<vmem>>, %arg2: memref<3x2x256xf32, #tpu.memory_space<vmem>>) attributes {dimension_semantics = [], scalar_prefetch = 0 : i64, scratch_operands = 0 : i64, tpu.core_type = #tpu.core_type<tc>} {
    %c0 = arith.constant 0 : index
    %c0_0 = arith.constant 0 : index
    %0 = vector.load %arg1[%c0, %c0_0] : memref<2x256xf32, #tpu.memory_space<vmem>>, vector<2x256xf32>
    %c0_1 = arith.constant 0 : index
    %c0_2 = arith.constant 0 : index
    %1 = memref.load %arg0[%c0_1, %c0_2] : memref<4x3xf32, #tpu.memory_space<smem>>
    %c1 = arith.constant 1 : index
    %c0_3 = arith.constant 0 : index
    %2 = memref.load %arg0[%c1, %c0_3] : memref<4x3xf32, #tpu.memory_space<smem>>
    %c2 = arith.constant 2 : index
    %c0_4 = arith.constant 0 : index
    %3 = memref.load %arg0[%c2, %c0_4] : memref<4x3xf32, #tpu.memory_space<smem>>
    %c3 = arith.constant 3 : index
    %c0_5 = arith.constant 0 : index
    %4 = memref.load %arg0[%c3, %c0_5] : memref<4x3xf32, #tpu.memory_space<smem>>
    %5 = vector.broadcast %1 : f32 to vector<2x256xf32>
    %6 = arith.mulf %0, %5 : vector<2x256xf32>
    %7 = vector.broadcast %2 : f32 to vector<2x256xf32>
    %8 = arith.addf %6, %7 : vector<2x256xf32>
    %9 = vector.shape_cast %8 : vector<2x256xf32> to vector<1x2x256xf32>
    %cst = arith.constant dense<0.000000e+00> : vector<1xf32>
    %10 = vector.multi_reduction <add>, %9, %cst [1, 2] : vector<1x2x256xf32> to vector<1xf32>
    %11 = vector.shape_cast %10 : vector<1xf32> to vector<1x1x1xf32>
    %12 = vector.extract %11[0, 0, 0] : f32 from vector<1x1x1xf32>
    %cst_6 = arith.constant 0.001953125 : f32
    %13 = arith.mulf %12, %cst_6 : f32
    %14 = vector.broadcast %13 : f32 to vector<2x256xf32>
    %15 = arith.subf %8, %14 : vector<2x256xf32>
    %16 = arith.mulf %15, %15 : vector<2x256xf32>
    %17 = vector.shape_cast %16 : vector<2x256xf32> to vector<1x2x256xf32>
    %cst_7 = arith.constant dense<0.000000e+00> : vector<1xf32>
    %18 = vector.multi_reduction <add>, %17, %cst_7 [1, 2] : vector<1x2x256xf32> to vector<1xf32>
    %19 = vector.shape_cast %18 : vector<1xf32> to vector<1x1x1xf32>
    %20 = vector.extract %19[0, 0, 0] : f32 from vector<1x1x1xf32>
    %cst_8 = arith.constant 0.001953125 : f32
    %21 = arith.mulf %20, %cst_8 : f32
    %cst_9 = arith.constant 9.99999974E-6 : f32
    %22 = arith.addf %21, %cst_9 : f32
    %23 = math.rsqrt %22 : f32
    %24 = arith.mulf %3, %23 : f32
    %25 = vector.broadcast %24 : f32 to vector<2x256xf32>
    %26 = arith.mulf %15, %25 : vector<2x256xf32>
    %27 = vector.broadcast %4 : f32 to vector<2x256xf32>
    %28 = arith.addf %26, %27 : vector<2x256xf32>
    %c0_10 = arith.constant 0 : index
    %c0_11 = arith.constant 0 : index
    %c0_12 = arith.constant 0 : index
    %29 = vector.load %arg2[%c0_10, %c0_11, %c0_12] : memref<3x2x256xf32, #tpu.memory_space<vmem>>, vector<1x2x256xf32>
    %30 = vector.shape_cast %29 : vector<1x2x256xf32> to vector<2x256xf32>
    %31 = vector.shape_cast %28 : vector<2x256xf32> to vector<1x2x256xf32>
    tpu.vector_store %arg2[%c0_10, %c0_11, %c0_12], %31 {strides = array<i32>} : memref<3x2x256xf32, #tpu.memory_space<vmem>>, vector<1x2x256xf32>,
    %c0_13 = arith.constant 0 : index
    %c1_14 = arith.constant 1 : index
    %32 = memref.load %arg0[%c0_13, %c1_14] : memref<4x3xf32, #tpu.memory_space<smem>>
    %c1_15 = arith.constant 1 : index
    %c1_16 = arith.constant 1 : index
    %33 = memref.load %arg0[%c1_15, %c1_16] : memref<4x3xf32, #tpu.memory_space<smem>>
    %c2_17 = arith.constant 2 : index
    %c1_18 = arith.constant 1 : index
    %34 = memref.load %arg0[%c2_17, %c1_18] : memref<4x3xf32, #tpu.memory_space<smem>>
    %c3_19 = arith.constant 3 : index
    %c1_20 = arith.constant 1 : index
    %35 = memref.load %arg0[%c3_19, %c1_20] : memref<4x3xf32, #tpu.memory_space<smem>>
    %36 = vector.broadcast %32 : f32 to vector<2x256xf32>
    %37 = arith.mulf %0, %36 : vector<2x256xf32>
    %38 = vector.broadcast %33 : f32 to vector<2x256xf32>
    %39 = arith.addf %37, %38 : vector<2x256xf32>
    %40 = vector.shape_cast %39 : vector<2x256xf32> to vector<1x2x256xf32>
    %cst_21 = arith.constant dense<0.000000e+00> : vector<1xf32>
    %41 = vector.multi_reduction <add>, %40, %cst_21 [1, 2] : vector<1x2x256xf32> to vector<1xf32>
    %42 = vector.shape_cast %41 : vector<1xf32> to vector<1x1x1xf32>
    %43 = vector.extract %42[0, 0, 0] : f32 from vector<1x1x1xf32>
    %cst_22 = arith.constant 0.001953125 : f32
    %44 = arith.mulf %43, %cst_22 : f32
    %45 = vector.broadcast %44 : f32 to vector<2x256xf32>
    %46 = arith.subf %39, %45 : vector<2x256xf32>
    %47 = arith.mulf %46, %46 : vector<2x256xf32>
    %48 = vector.shape_cast %47 : vector<2x256xf32> to vector<1x2x256xf32>
    %cst_23 = arith.constant dense<0.000000e+00> : vector<1xf32>
    %49 = vector.multi_reduction <add>, %48, %cst_23 [1, 2] : vector<1x2x256xf32> to vector<1xf32>
    %50 = vector.shape_cast %49 : vector<1xf32> to vector<1x1x1xf32>
    %51 = vector.extract %50[0, 0, 0] : f32 from vector<1x1x1xf32>
    %cst_24 = arith.constant 0.001953125 : f32
    %52 = arith.mulf %51, %cst_24 : f32
    %cst_25 = arith.constant 9.99999974E-6 : f32
    %53 = arith.addf %52, %cst_25 : f32
    %54 = math.rsqrt %53 : f32
    %55 = arith.mulf %34, %54 : f32
    %56 = vector.broadcast %55 : f32 to vector<2x256xf32>
    %57 = arith.mulf %46, %56 : vector<2x256xf32>
    %58 = vector.broadcast %35 : f32 to vector<2x256xf32>
    %59 = arith.addf %57, %58 : vector<2x256xf32>
    %c1_26 = arith.constant 1 : index
    %c0_27 = arith.constant 0 : index
    %c0_28 = arith.constant 0 : index
    %60 = vector.load %arg2[%c1_26, %c0_27, %c0_28] : memref<3x2x256xf32, #tpu.memory_space<vmem>>, vector<1x2x256xf32>
    %61 = vector.shape_cast %60 : vector<1x2x256xf32> to vector<2x256xf32>
    %62 = vector.shape_cast %59 : vector<2x256xf32> to vector<1x2x256xf32>
    tpu.vector_store %arg2[%c1_26, %c0_27, %c0_28], %62 {strides = array<i32>} : memref<3x2x256xf32, #tpu.memory_space<vmem>>, vector<1x2x256xf32>,
    %c0_29 = arith.constant 0 : index
    %c2_30 = arith.constant 2 : index
    %63 = memref.load %arg0[%c0_29, %c2_30] : memref<4x3xf32, #tpu.memory_space<smem>>
    %c1_31 = arith.constant 1 : index
    %c2_32 = arith.constant 2 : index
    %64 = memref.load %arg0[%c1_31, %c2_32] : memref<4x3xf32, #tpu.memory_space<smem>>
    %c2_33 = arith.constant 2 : index
    %c2_34 = arith.constant 2 : index
    %65 = memref.load %arg0[%c2_33, %c2_34] : memref<4x3xf32, #tpu.memory_space<smem>>
    %c3_35 = arith.constant 3 : index
    %c2_36 = arith.constant 2 : index
    %66 = memref.load %arg0[%c3_35, %c2_36] : memref<4x3xf32, #tpu.memory_space<smem>>
    %67 = vector.broadcast %63 : f32 to vector<2x256xf32>
    %68 = arith.mulf %0, %67 : vector<2x256xf32>
    %69 = vector.broadcast %64 : f32 to vector<2x256xf32>
    %70 = arith.addf %68, %69 : vector<2x256xf32>
    %71 = vector.shape_cast %70 : vector<2x256xf32> to vector<1x2x256xf32>
    %cst_37 = arith.constant dense<0.000000e+00> : vector<1xf32>
    %72 = vector.multi_reduction <add>, %71, %cst_37 [1, 2] : vector<1x2x256xf32> to vector<1xf32>
    %73 = vector.shape_cast %72 : vector<1xf32> to vector<1x1x1xf32>
    %74 = vector.extract %73[0, 0, 0] : f32 from vector<1x1x1xf32>
    %cst_38 = arith.constant 0.001953125 : f32
    %75 = arith.mulf %74, %cst_38 : f32
    %76 = vector.broadcast %75 : f32 to vector<2x256xf32>
    %77 = arith.subf %70, %76 : vector<2x256xf32>
    %78 = arith.mulf %77, %77 : vector<2x256xf32>
    %79 = vector.shape_cast %78 : vector<2x256xf32> to vector<1x2x256xf32>
    %cst_39 = arith.constant dense<0.000000e+00> : vector<1xf32>
    %80 = vector.multi_reduction <add>, %79, %cst_39 [1, 2] : vector<1x2x256xf32> to vector<1xf32>
    %81 = vector.shape_cast %80 : vector<1xf32> to vector<1x1x1xf32>
    %82 = vector.extract %81[0, 0, 0] : f32 from vector<1x1x1xf32>
    %cst_40 = arith.constant 0.001953125 : f32
    %83 = arith.mulf %82, %cst_40 : f32
    %cst_41 = arith.constant 9.99999974E-6 : f32
    %84 = arith.addf %83, %cst_41 : f32
    %85 = math.rsqrt %84 : f32
    %86 = arith.mulf %65, %85 : f32
    %87 = vector.broadcast %86 : f32 to vector<2x256xf32>
    %88 = arith.mulf %77, %87 : vector<2x256xf32>
    %89 = vector.broadcast %66 : f32 to vector<2x256xf32>
    %90 = arith.addf %88, %89 : vector<2x256xf32>
    %c2_42 = arith.constant 2 : index
    %c0_43 = arith.constant 0 : index
    %c0_44 = arith.constant 0 : index
    %91 = vector.load %arg2[%c2_42, %c0_43, %c0_44] : memref<3x2x256xf32, #tpu.memory_space<vmem>>, vector<1x2x256xf32>
    %92 = vector.shape_cast %91 : vector<1x2x256xf32> to vector<2x256xf32>
    %93 = vector.shape_cast %90 : vector<2x256xf32> to vector<1x2x256xf32>
    tpu.vector_store %arg2[%c2_42, %c0_43, %c0_44], %93 {strides = array<i32>} : memref<3x2x256xf32, #tpu.memory_space<vmem>>, vector<1x2x256xf32>,
    return
  }
}

</mosaic_0001>

<llo_original>
// kernel: tpu_custom_call.1
$region0: #{tpu_custom_call.1}
  #allocation0 [shape = 'u32[]', space=smem, size = 0x4, offset = 0x4, fixed_abs, tag = 'smem constant byte address 0x4 - core index']
  #allocation1 [shape = 'u32[144,128]{1,0:T(1,128)}', space=vmem, size = 0x12000, scoped, tag = 'internal scratch']
  %s0 = inlined_call_operand.hbm [shape: f32[4,3], index: 0, kind: input, shape index: {}]
  %s1 = inlined_call_operand.hbm [shape: f32[2,256], index: 1, kind: input, shape index: {}]
  %s2 = inlined_call_operand.hbm [shape: f32[3,2,256], index: 2, kind: output, shape index: {}]
  %s3 = sld [smem:[#allocation0]]
  $region26: #{tpu_custom_call.1} parent=0
    _
  %s5 = ssub.s32 1, %s3
  %s6 = scalar_select 0, %s5, %s3
  $region1: #{tpu_custom_call.1} parent=0
    #allocation2 [shape = 'u8[2048]{0}', space=smem, size = 0x800, scoped, tag = 'input window, operand 0, single buffered']
    #allocation3 [shape = 's32[1]{0}', space=sflag, size = 0x4, scoped, tag = 'scoped memory for tpu_custom_call.1']
    #allocation4 [shape = 's32[1]{0}', space=sflag, size = 0x4, scoped, tag = 'scoped memory for tpu_custom_call.1']
    #allocation5 [shape = 's32[1]{0}', space=sflag, size = 0x4, scoped, tag = 'scoped memory for tpu_custom_call.1']
    #allocation6 [shape = 'u8[2048]{0}', space=vmem, size = 0x800, scoped, tag = 'input window, operand 1, single buffered']
    #allocation7 [shape = 'u8[6144]{0}', space=vmem, size = 0x1800, scoped, tag = 'output window, operand 0, single buffered']
    %7 = vsyncpa [#allocation5], 0
    %8 = vsyncpa [#allocation3], 0
    %9 = vsyncpa [#allocation4], 0
    // Predicated region
    $region2: #{tpu_custom_call.1} parent=1 // pred_check
      _
    $region3: #{tpu_custom_call.1} parent=1 // pred_check_branch
      %11 = sbr.rel (0) target = $region5
    $region4: #{tpu_custom_call.1} parent=1 // pred_region
      %s13 = ssub.s32 64, 64
      %14 = vsyncadd [#allocation5], %s13
      %17 = dma.hbm_to_smem %s0, 64, [#allocation2], [#allocation5]
    $region5: #{tpu_custom_call.1} parent=1 // pred_fallthru
      _
    // Predicated region
    $region6: #{tpu_custom_call.1} parent=1 // pred_check
      _
    $region7: #{tpu_custom_call.1} parent=1 // pred_check_branch
      %19 = sbr.rel (0) target = $region9
    $region8: #{tpu_custom_call.1} parent=1 // pred_region
      %s21 = ssub.s32 64, 64
      %22 = vsyncadd [#allocation3], %s21
      %s24 = sshll.u32 [#allocation6], 4
      %s25 = int_to_ptr.vmem [resolvable:$true] %s24
      %27 = dma.hbm_to_vmem [thread:$0]  %s1, 64, %s25, [#allocation3]
    $region9: #{tpu_custom_call.1} parent=1 // pred_fallthru
      _
    // Predicated region
    $region10: #{tpu_custom_call.1} parent=1 // pred_check
      _
    $region11: #{tpu_custom_call.1} parent=1 // pred_check_branch
      %29 = sbr.rel (0) target = $region13
    $region12: #{tpu_custom_call.1} parent=1 // pred_region
      %30 = dma.done [#allocation5], 64
    $region13: #{tpu_custom_call.1} parent=1 // pred_fallthru
      _
    // Predicated region
    $region14: #{tpu_custom_call.1} parent=1 // pred_check
      _
    $region15: #{tpu_custom_call.1} parent=1 // pred_check_branch
      %32 = sbr.rel (0) target = $region17
    $region16: #{tpu_custom_call.1} parent=1 // pred_region
      %33 = dma.done [#allocation3], 64
    $region17: #{tpu_custom_call.1} parent=1 // pred_fallthru
      _
    %34 = sfence
    %v35 = vld [vmem:[#allocation6] sm:$0xf]
    %s36 = sld [smem:[#allocation2]]
    %s37 = sld [smem:[#allocation2 + $0x80]]
    %s38 = sld [smem:[#allocation2 + $0x100]]
    %s39 = sld [smem:[#allocation2 + $0x180]]
    %v40 = vstv %s36
    %v41 = vmul.f32 %v35, %v40
    %v42 = vstv %s37
    %v43 = vadd.f32 %v41, %v42
    %v46 = vunpack.c.l.s4 1983009808
    %v47 = vunpack.c.0.s8 %v46
    %v48 = vlaneseq
    %v49 = vshrl.u32 %v48, 7
    %v50 = vsub.s32 %v47, %v49
    %v51 = vrot.slane %v43, %v50
    %v52 = vcombine.high %v51, %v51
    %vm55 = vcmask 1041408
    %v56 = vsel %vm55, %v51, 0.0
    %v57 = vsel %vm55, %v52, 0.0
    %v58 = vadd.f32 %v56, %v57
    %59 = vadd.xlane.f32.xlu0 %v58
    %v60 = vpop.xlane.xlu0 %59
    %v61 = vrot.slane %v60, 4
    %v62 = vadd.f32 %v60, %v61
    %v63 = vrot.slane %v62, 2
    %v64 = vadd.f32 %v62, %v63
    %v65 = vrot.slane %v64, 1
    %v66 = vadd.f32 %v64, %v65
    %s67 = vtos %v66
    %s68 = smul.f32 %s67, 0.001953125
    %v69 = vstv %s68
    %v70 = vsub.f32 %v43, %v69
    %v71 = vmul.f32 %v70, %v70
    %v74 = vunpack.c.l.s4 1983009808
    %v75 = vunpack.c.0.s8 %v74
    %v76 = vlaneseq
    %v77 = vshrl.u32 %v76, 7
    %v78 = vsub.s32 %v75, %v77
    %v79 = vrot.slane %v71, %v78
    %v80 = vcombine.high %v79, %v79
    %v83 = vsel %vm55, %v79, 0.0
    %v84 = vsel %vm55, %v80, 0.0
    %v85 = vadd.f32 %v83, %v84
    %86 = vadd.xlane.f32.xlu0 %v85
    %v87 = vpop.xlane.xlu0 %86
    %v88 = vrot.slane %v87, 4
    %v89 = vadd.f32 %v87, %v88
    %v90 = vrot.slane %v89, 2
    %v91 = vadd.f32 %v89, %v90
    %v92 = vrot.slane %v91, 1
    %v93 = vadd.f32 %v91, %v92
    %s94 = vtos %v93
    %s95 = smul.f32 %s94, 0.001953125
    %s96 = sadd.f32 %s95, 1e-05
    %v97 = vstv %s96
    %v98 = vrsqrt.pop %v97
    %s99 = vtos %v98
    %s100 = smul.f32 %s38, %s99
    %v101 = vstv %s100
    %v102 = vmul.f32 %v70, %v101
    %v103 = vstv %s39
    %v104 = vadd.f32 %v102, %v103
    %105 = vst [vmem:[#allocation7] sm:$0xf] %v104
    %s106 = sld [smem:[#allocation2 + $0x1]]
    %s107 = sld [smem:[#allocation2 + $0x81]]
    %s108 = sld [smem:[#allocation2 + $0x101]]
    %s109 = sld [smem:[#allocation2 + $0x181]]
    %v110 = vstv %s106
    %v111 = vmul.f32 %v35, %v110
    %v112 = vstv %s107
    %v113 = vadd.f32 %v111, %v112
    %v116 = vunpack.c.l.s4 1983009808
    %v117 = vunpack.c.0.s8 %v116
    %v118 = vlaneseq
    %v119 = vshrl.u32 %v118, 7
    %v120 = vsub.s32 %v117, %v119
    %v121 = vrot.slane %v113, %v120
    %v122 = vcombine.high %v121, %v121
    %v125 = vsel %vm55, %v121, 0.0
    %v126 = vsel %vm55, %v122, 0.0
    %v127 = vadd.f32 %v125, %v126
    %128 = vadd.xlane.f32.xlu0 %v127
    %v129 = vpop.xlane.xlu0 %128
    %v130 = vrot.slane %v129, 4
    %v131 = vadd.f32 %v129, %v130
    %v132 = vrot.slane %v131, 2
    %v133 = vadd.f32 %v131, %v132
    %v134 = vrot.slane %v133, 1
    %v135 = vadd.f32 %v133, %v134
    %s136 = vtos %v135
    %s137 = smul.f32 %s136, 0.001953125
    %v138 = vstv %s137
    %v139 = vsub.f32 %v113, %v138
    %v140 = vmul.f32 %v139, %v139
    %v143 = vunpack.c.l.s4 1983009808
    %v144 = vunpack.c.0.s8 %v143
    %v145 = vlaneseq
    %v146 = vshrl.u32 %v145, 7
    %v147 = vsub.s32 %v144, %v146
    %v148 = vrot.slane %v140, %v147
    %v149 = vcombine.high %v148, %v148
    %v152 = vsel %vm55, %v148, 0.0
    %v153 = vsel %vm55, %v149, 0.0
    %v154 = vadd.f32 %v152, %v153
    %155 = vadd.xlane.f32.xlu0 %v154
    %v156 = vpop.xlane.xlu0 %155
    %v157 = vrot.slane %v156, 4
    %v158 = vadd.f32 %v156, %v157
    %v159 = vrot.slane %v158, 2
    %v160 = vadd.f32 %v158, %v159
    %v161 = vrot.slane %v160, 1
    %v162 = vadd.f32 %v160, %v161
    %s163 = vtos %v162
    %s164 = smul.f32 %s163, 0.001953125
    %s165 = sadd.f32 %s164, 1e-05
    %v166 = vstv %s165
    %v167 = vrsqrt.pop %v166
    %s168 = vtos %v167
    %s169 = smul.f32 %s108, %s168
    %v170 = vstv %s169
    %v171 = vmul.f32 %v139, %v170
    %v172 = vstv %s109
    %v173 = vadd.f32 %v171, %v172
    %s174 = scalar_lea.vmem [#allocation7], 4
    %175 = vst [vmem:[%s174] sm:$0xf] %v173
    %s176 = sld [smem:[#allocation2 + $0x2]]
    %s177 = sld [smem:[#allocation2 + $0x82]]
    %s178 = sld [smem:[#allocation2 + $0x102]]
    %s179 = sld [smem:[#allocation2 + $0x182]]
    %v180 = vstv %s176
    %v181 = vmul.f32 %v35, %v180
    %v182 = vstv %s177
    %v183 = vadd.f32 %v181, %v182
    %v186 = vunpack.c.l.s4 1983009808
    %v187 = vunpack.c.0.s8 %v186
    %v188 = vlaneseq
    %v189 = vshrl.u32 %v188, 7
    %v190 = vsub.s32 %v187, %v189
    %v191 = vrot.slane %v183, %v190
    %v192 = vcombine.high %v191, %v191
    %v195 = vsel %vm55, %v191, 0.0
    %v196 = vsel %vm55, %v192, 0.0
    %v197 = vadd.f32 %v195, %v196
    %198 = vadd.xlane.f32.xlu0 %v197
    %v199 = vpop.xlane.xlu0 %198
    %v200 = vrot.slane %v199, 4
    %v201 = vadd.f32 %v199, %v200
    %v202 = vrot.slane %v201, 2
    %v203 = vadd.f32 %v201, %v202
    %v204 = vrot.slane %v203, 1
    %v205 = vadd.f32 %v203, %v204
    %s206 = vtos %v205
    %s207 = smul.f32 %s206, 0.001953125
    %v208 = vstv %s207
    %v209 = vsub.f32 %v183, %v208
    %v210 = vmul.f32 %v209, %v209
    %v213 = vunpack.c.l.s4 1983009808
    %v214 = vunpack.c.0.s8 %v213
    %v215 = vlaneseq
    %v216 = vshrl.u32 %v215, 7
    %v217 = vsub.s32 %v214, %v216
    %v218 = vrot.slane %v210, %v217
    %v219 = vcombine.high %v218, %v218
    %v222 = vsel %vm55, %v218, 0.0
    %v223 = vsel %vm55, %v219, 0.0
    %v224 = vadd.f32 %v222, %v223
    %225 = vadd.xlane.f32.xlu0 %v224
    %v226 = vpop.xlane.xlu0 %225
    %v227 = vrot.slane %v226, 4
    %v228 = vadd.f32 %v226, %v227
    %v229 = vrot.slane %v228, 2
    %v230 = vadd.f32 %v228, %v229
    %v231 = vrot.slane %v230, 1
    %v232 = vadd.f32 %v230, %v231
    %s233 = vtos %v232
    %s234 = smul.f32 %s233, 0.001953125
    %s235 = sadd.f32 %s234, 1e-05
    %v236 = vstv %s235
    %v237 = vrsqrt.pop %v236
    %s238 = vtos %v237
    %s239 = smul.f32 %s178, %s238
    %v240 = vstv %s239
    %v241 = vmul.f32 %v209, %v240
    %v242 = vstv %s179
    %v243 = vadd.f32 %v241, %v242
    %s244 = scalar_lea.vmem [#allocation7], 8
    %245 = vst [vmem:[%s244] sm:$0xf] %v243
    // Predicated region
    $region18: #{tpu_custom_call.1} parent=1 // pred_check
      _
    $region19: #{tpu_custom_call.1} parent=1 // pred_check_branch
      %247 = sbr.rel (0) target = $region21
    $region20: #{tpu_custom_call.1} parent=1 // pred_region
      %s249 = ssub.s32 192, 192
      %250 = vsyncadd [#allocation4], %s249
      %s251 = sshll.u32 [#allocation7], 4
      %s252 = int_to_ptr.vmem [resolvable:$true] %s251
      %257 = dma.vmem_to_hbm [thread:$0]  %s252, 192, %s2, [#allocation4], 64, 64, 4
    $region21: #{tpu_custom_call.1} parent=1 // pred_fallthru
      _
    // Predicated region
    $region22: #{tpu_custom_call.1} parent=1 // pred_check
      _
    $region23: #{tpu_custom_call.1} parent=1 // pred_check_branch
      %259 = sbr.rel (0) target = $region25
    $region24: #{tpu_custom_call.1} parent=1 // pred_region
      %260 = dma.done [#allocation4], 192
    $region25: #{tpu_custom_call.1} parent=1 // pred_fallthru
      _
    %261 = vsyncpa [#allocation3], 1
    %262 = vsyncpa [#allocation4], 1
    %263 = vsyncpa [#allocation5], 1

</llo_original>
